<compile_context>
chip_gen: v6e
topology: v6e:2x2x1
jax: 0.10.0
libtpu: 0.0.40
codegen_flags: <defaults>
</compile_context>

<pallas_src>
import numpy as np
import jax
import jax.numpy as jnp
from jax.experimental import pallas as pl
from jax.experimental.pallas import tpu as pltpu


# ----------------------------- deterministic "parameters" -------------------
def _hz_to_mel(f):
    f = np.asarray(f, dtype=np.float64)
    f_sp = 200.0 / 3
    mels = f / f_sp
    min_log_hz = 1000.0
    min_log_mel = min_log_hz / f_sp
    logstep = np.log(6.4) / 27.0
    return np.where(
        f >= min_log_hz,
        min_log_mel + np.log(np.maximum(f, min_log_hz) / min_log_hz) / logstep,
        mels,
    )


def _mel_to_hz(m):
    m = np.asarray(m, dtype=np.float64)
    f_sp = 200.0 / 3
    freqs = f_sp * m
    min_log_hz = 1000.0
    min_log_mel = min_log_hz / f_sp
    logstep = np.log(6.4) / 27.0
    return np.where(
        m >= min_log_mel, min_log_hz * np.exp(logstep * (m - min_log_mel)), freqs
    )


def mel_filterbank(sr, n_fft, n_mels):
    """Slaney-style mel filterbank, shape [n_mels, n_fft//2+1] (librosa default)."""
    n_freq = n_fft // 2 + 1
    fftfreqs = np.linspace(0.0, sr / 2.0, n_freq)
    mel_pts = _mel_to_hz(np.linspace(_hz_to_mel(0.0), _hz_to_mel(sr / 2.0), n_mels + 2))
    fdiff = np.diff(mel_pts)
    ramps = mel_pts[:, None] - fftfreqs[None, :]
    lower = -ramps[:-2] / fdiff[:-1, None]
    upper = ramps[2:] / fdiff[1:, None]
    weights = np.maximum(0.0, np.minimum(lower, upper))
    enorm = 2.0 / (mel_pts[2 : n_mels + 2] - mel_pts[:n_mels])
    weights *= enorm[:, None]
    return weights.astype(np.float32)


def hann_window(n_fft):
    """Periodic Hann window (librosa default), shape [n_fft]."""
    n = np.arange(n_fft)
    return (0.5 - 0.5 * np.cos(2.0 * np.pi * n / n_fft)).astype(np.float64)


def _round_up(x, m):
    return ((x + m - 1) // m) * m


# ----------------------------------- kernel ---------------------------------
def make_mel_kernel(ratio, f_pad):
    def mel_kernel(y_ref, dft_ref, fb_ref, out_ref):
        # Reassemble overlapping frames implicitly via split-K matmul:
        #   frame_t = concat_k y_views[k, t]  =>  frame @ W == sum_k y_views[k] @ W[k]
        spec = None
        for k in range(ratio):                               # static unroll
            part = jnp.dot(
                y_ref[k].astype(jnp.bfloat16),               # (t_blk, hop)
                dft_ref[k],                                  # (hop, 2*f_pad) bf16 (window folded in)
                preferred_element_type=jnp.float32,
            )
            spec = part if spec is None else spec + part     # (t_blk, 2*f_pad) f32

        re = spec[:, :f_pad]                                 # lane-aligned slices
        im = spec[:, f_pad:]
        power = re * re + im * im                            # f32, padded freq cols are exactly 0

        mel = jnp.dot(
            power.astype(jnp.bfloat16), fb_ref[...],         # (f_pad, m_pad) bf16
            preferred_element_type=jnp.float32,
        )
        out_ref[...] = jnp.log(mel + 1e-6)                   # (t_blk, m_pad) f32

    return mel_kernel


# ---------------------------------- wrapper ----------------------------------
def wav2mel(audio, *, sample_rate, window_size_ms, stride_ms, n_mels, t_blk=256):
    n_fft = int(sample_rate * 0.001 * window_size_ms)
    hop = int(sample_rate * 0.001 * stride_ms)
    n_freq = n_fft // 2 + 1

    # TODO(synk): in-kernel framing assumes hop divides n_fft (true for the module's
    # 16ms/8ms defaults); a general hop would need an element-offset / manual-DMA path.
    assert n_fft % hop == 0, "hop must divide n_fft for in-kernel framing"
    ratio = n_fft // hop

    f_pad = _round_up(n_freq, 128)   # lane-dense freq dim
    m_pad = _round_up(n_mels, 128)   # lane-dense output dim

    # center=True STFT padding (reflect), like librosa.stft
    pad = n_fft // 2
    y = jnp.pad(audio.astype(jnp.float32), (pad, pad), mode="reflect")
    n_frames = 1 + (y.shape[0] - n_fft) // hop

    # time tile: whole clip in one step when short, else big multiples of 8
    t_blk = min(t_blk, _round_up(n_frames, 8))
    t_blk = max(8, (t_blk // 8) * 8)
    t_pad = _round_up(n_frames, t_blk)

    needed = (t_pad + ratio - 1) * hop
    if needed > y.shape[0]:
        y = jnp.pad(y, (0, needed - y.shape[0]))

    # `ratio` hop-strided, NON-overlapping reshaped views of the padded audio.
    # frame_t == concat_k y_views[k, t]; no gather / no 2x-overlap materialization.
    y_views = jnp.stack(
        [jnp.reshape(y[k * hop : (k + t_pad) * hop], (t_pad, hop)) for k in range(ratio)]
    )  # (ratio, t_pad, hop) f32

    # Constants: Hann window folded into the fused cos|sin real-DFT matrix (bf16).
    win = hann_window(n_fft)                                  # (n_fft,)
    n = np.arange(n_fft, dtype=np.float64)[:, None]
    k = np.arange(n_freq, dtype=np.float64)[None, :]
    ang = 2.0 * np.pi * n * k / n_fft
    dft = np.zeros((n_fft, 2 * f_pad), np.float32)
    dft[:, :n_freq] = (win[:, None] * np.cos(ang)).astype(np.float32)
    dft[:, f_pad : f_pad + n_freq] = (win[:, None] * np.sin(ang)).astype(np.float32)
    dft = jnp.asarray(dft.reshape(ratio, hop, 2 * f_pad), dtype=jnp.bfloat16)

    fb = np.zeros((f_pad, m_pad), np.float32)
    fb[:n_freq, :n_mels] = mel_filterbank(sample_rate, n_fft, n_mels).T
    fb = jnp.asarray(fb, dtype=jnp.bfloat16)

    out = pl.pallas_call(
        make_mel_kernel(ratio, f_pad),
        out_shape=jax.ShapeDtypeStruct((t_pad, m_pad), jnp.float32),
        grid=(t_pad // t_blk,),
        in_specs=[
            pl.BlockSpec((ratio, t_blk, hop), lambda i: (0, i, 0)),
            pl.BlockSpec((ratio, hop, 2 * f_pad), lambda i: (0, 0, 0)),  # resident
            pl.BlockSpec((f_pad, m_pad), lambda i: (0, 0)),              # resident
        ],
        out_specs=pl.BlockSpec((t_blk, m_pad), lambda i: (i, 0)),
        compiler_params=pltpu.CompilerParams(dimension_semantics=("parallel",)),
    )(y_views, dft, fb)

    # drop padded frames / padded mel bins, transpose to librosa (n_mels, n_frames)
    return out[:n_frames, :n_mels].T


# ------------------------------------ main -----------------------------------
if __name__ == "__main__":
    # args consistent with the module: feature='fbank', delta=False, delta_delta=False
    sample_rate = 8000
    window_size_ms = 16          # -> n_fft = 128
    stride_ms = 8                # -> hop   = 64
    n_mels = 32                  # feature_dim
    num_samples = 2048

    key = jax.random.PRNGKey(0)
    wav_tensor = jax.random.normal(key, (num_samples,), dtype=jnp.float32)

    mel_spec = wav2mel(
        wav_tensor,
        sample_rate=sample_rate,
        window_size_ms=window_size_ms,
        stride_ms=stride_ms,
        n_mels=n_mels,
    )
    mel_spec = jax.block_until_ready(mel_spec)

    assert mel_spec.shape == (n_mels, 1 + num_samples // (sample_rate // 1000 * stride_ms))
    assert mel_spec.dtype == jnp.float32
    assert bool(jnp.all(jnp.isfinite(mel_spec)))
    print("KERNEL_OK")
</pallas_src>

<mosaic_0001>
module attributes {stable_mosaic.version = 11 : i64} {
  func.func @mel_kernel(%arg0: i32, %arg1: memref<2x40x64xf32, #tpu.memory_space<vmem>>, %arg2: memref<2x64x256xbf16, #tpu.memory_space<vmem>>, %arg3: memref<128x128xbf16, #tpu.memory_space<vmem>>, %arg4: memref<40x128xf32, #tpu.memory_space<vmem>>) attributes {dimension_semantics = [#tpu.dimension_semantics<parallel>], iteration_bounds = array<i64: 1>, scalar_prefetch = 0 : i64, scratch_operands = 0 : i64, tpu.core_type = #tpu.core_type<tc>, window_params = [{transform_indices = @transform_0, window_bounds = array<i64: 2, 40, 64>}, {pipeline_mode = #tpu.pipeline_mode<synchronous>, transform_indices = @transform_1, window_bounds = array<i64: 2, 64, 256>}, {pipeline_mode = #tpu.pipeline_mode<synchronous>, transform_indices = @transform_2, window_bounds = array<i64: 128, 128>}, {transform_indices = @transform_3, window_bounds = array<i64: 40, 128>}]} {
    %c0 = arith.constant 0 : index
    %c0_0 = arith.constant 0 : index
    %c0_1 = arith.constant 0 : index
    %0 = vector.load %arg1[%c0, %c0_0, %c0_1] : memref<2x40x64xf32, #tpu.memory_space<vmem>>, vector<1x40x64xf32>
    %1 = vector.shape_cast %0 : vector<1x40x64xf32> to vector<40x64xf32>
    %2 = arith.truncf %1 : vector<40x64xf32> to vector<40x64xbf16>
    %c0_2 = arith.constant 0 : index
    %c0_3 = arith.constant 0 : index
    %c0_4 = arith.constant 0 : index
    %3 = vector.load %arg2[%c0_2, %c0_3, %c0_4] : memref<2x64x256xbf16, #tpu.memory_space<vmem>>, vector<1x64x256xbf16>
    %4 = vector.shape_cast %3 : vector<1x64x256xbf16> to vector<64x256xbf16>
    %cst = arith.constant dense<0.000000e+00> : vector<40x256xf32>
    %5 = tpu.matmul %2, %4, %cst {dimension_numbers = #tpu.dot_dimension_numbers<[1], [0], [0], [1], [0, 0, 1, 1], [], []>} : vector<40x64xbf16>, vector<64x256xbf16>, vector<40x256xf32> -> vector<40x256xf32>
    %c1 = arith.constant 1 : index
    %c0_5 = arith.constant 0 : index
    %c0_6 = arith.constant 0 : index
    %6 = vector.load %arg1[%c1, %c0_5, %c0_6] : memref<2x40x64xf32, #tpu.memory_space<vmem>>, vector<1x40x64xf32>
    %7 = vector.shape_cast %6 : vector<1x40x64xf32> to vector<40x64xf32>
    %8 = arith.truncf %7 : vector<40x64xf32> to vector<40x64xbf16>
    %c1_7 = arith.constant 1 : index
    %c0_8 = arith.constant 0 : index
    %c0_9 = arith.constant 0 : index
    %9 = vector.load %arg2[%c1_7, %c0_8, %c0_9] : memref<2x64x256xbf16, #tpu.memory_space<vmem>>, vector<1x64x256xbf16>
    %10 = vector.shape_cast %9 : vector<1x64x256xbf16> to vector<64x256xbf16>
    %cst_10 = arith.constant dense<0.000000e+00> : vector<40x256xf32>
    %11 = tpu.matmul %8, %10, %cst_10 {dimension_numbers = #tpu.dot_dimension_numbers<[1], [0], [0], [1], [0, 0, 1, 1], [], []>} : vector<40x64xbf16>, vector<64x256xbf16>, vector<40x256xf32> -> vector<40x256xf32>
    %12 = arith.addf %5, %11 : vector<40x256xf32>
    %13 = vector.extract_strided_slice %12 {offsets = [0, 0], sizes = [40, 128], strides = [1, 1]} : vector<40x256xf32> to vector<40x128xf32>
    %14 = vector.extract_strided_slice %12 {offsets = [0, 128], sizes = [40, 128], strides = [1, 1]} : vector<40x256xf32> to vector<40x128xf32>
    %15 = arith.mulf %13, %13 : vector<40x128xf32>
    %16 = arith.mulf %14, %14 : vector<40x128xf32>
    %17 = arith.addf %15, %16 : vector<40x128xf32>
    %18 = arith.truncf %17 : vector<40x128xf32> to vector<40x128xbf16>
    %c0_11 = arith.constant 0 : index
    %c0_12 = arith.constant 0 : index
    %19 = vector.load %arg3[%c0_11, %c0_12] : memref<128x128xbf16, #tpu.memory_space<vmem>>, vector<128x128xbf16>
    %cst_13 = arith.constant dense<0.000000e+00> : vector<40x128xf32>
    %20 = tpu.matmul %18, %19, %cst_13 {dimension_numbers = #tpu.dot_dimension_numbers<[1], [0], [0], [1], [0, 0, 1, 1], [], []>} : vector<40x128xbf16>, vector<128x128xbf16>, vector<40x128xf32> -> vector<40x128xf32>
    %cst_14 = arith.constant 9.99999997E-7 : f32
    %21 = vector.broadcast %cst_14 : f32 to vector<40x128xf32>
    %22 = arith.addf %20, %21 : vector<40x128xf32>
    %23 = math.log %22 : vector<40x128xf32>
    %c0_15 = arith.constant 0 : index
    %c0_16 = arith.constant 0 : index
    %24 = vector.load %arg4[%c0_15, %c0_16] : memref<40x128xf32, #tpu.memory_space<vmem>>, vector<40x128xf32>
    tpu.vector_store %arg4[%c0_15, %c0_16], %23 {strides = array<i32>} : memref<40x128xf32, #tpu.memory_space<vmem>>, vector<40x128xf32>,
    return
  }
  func.func @transform_0(%arg0: i32) -> (i32, i32, i32) {
    %c0_i32 = arith.constant 0 : i32
    %c0_i32_0 = arith.constant 0 : i32
    %c0_i32_1 = arith.constant 0 : i32
    return %c0_i32, %arg0, %c0_i32_0 : i32, i32, i32
  }
  func.func @transform_1(%arg0: i32) -> (i32, i32, i32) {
    %c0_i32 = arith.constant 0 : i32
    %c0_i32_0 = arith.constant 0 : i32
    %c0_i32_1 = arith.constant 0 : i32
    %c0_i32_2 = arith.constant 0 : i32
    return %c0_i32, %c0_i32_0, %c0_i32_1 : i32, i32, i32
  }
  func.func @transform_2(%arg0: i32) -> (i32, i32) {
    %c0_i32 = arith.constant 0 : i32
    %c0_i32_0 = arith.constant 0 : i32
    %c0_i32_1 = arith.constant 0 : i32
    return %c0_i32, %c0_i32_0 : i32, i32
  }
  func.func @transform_3(%arg0: i32) -> (i32, i32) {
    %c0_i32 = arith.constant 0 : i32
    %c0_i32_0 = arith.constant 0 : i32
    return %arg0, %c0_i32 : i32, i32
  }
}

</mosaic_0001>

<llo_original>
// kernel: tpu_custom_call.1
$region0: #{tpu_custom_call.1}
  #allocation0 [shape = 'u32[]', space=smem, size = 0x4, offset = 0x4, fixed_abs, tag = 'smem constant byte address 0x4 - core index']
  #allocation1 [shape = 'u32[144,128]{1,0:T(1,128)}', space=vmem, size = 0x12000, scoped, tag = 'internal scratch']
  %s0 = inlined_call_operand.hbm [shape: f32[2,40,64], index: 0, kind: input, shape index: {}]
  %s1 = inlined_call_operand.hbm [shape: bf16[2,64,256], index: 1, kind: input, shape index: {}]
  %s2 = inlined_call_operand.hbm [shape: bf16[128,128], index: 2, kind: input, shape index: {}]
  %s3 = inlined_call_operand.hbm [shape: f32[40,128], index: 3, kind: output, shape index: {}]
  %s4 = sld [smem:[#allocation0]]
  $region34: #{tpu_custom_call.1} parent=0
    _
  %s6 = ssub.s32 1, %s4
  %s7 = scalar_select 0, %s6, %s4
  $region1: #{tpu_custom_call.1} parent=0
    #allocation2 [shape = 'u8[40960]{0}', space=vmem, size = 0xa000, scoped, tag = 'input window, operand 0, single buffered']
    #allocation3 [shape = 's32[1]{0}', space=sflag, size = 0x4, scoped, tag = 'scoped memory for tpu_custom_call.1']
    #allocation4 [shape = 's32[1]{0}', space=sflag, size = 0x4, scoped, tag = 'scoped memory for tpu_custom_call.1']
    #allocation5 [shape = 'u8[65536]{0}', space=vmem, size = 0x10000, scoped, tag = 'input window, operand 1, single buffered']
    #allocation6 [shape = 's32[1]{0}', space=sflag, size = 0x4, scoped, tag = 'scoped memory for tpu_custom_call.1']
    #allocation7 [shape = 'u8[32768]{0}', space=vmem, size = 0x8000, scoped, tag = 'input window, operand 2, single buffered']
    #allocation8 [shape = 'u8[20480]{0}', space=vmem, size = 0x5000, scoped, tag = 'output window, operand 0, single buffered']
    %8 = vsyncpa [#allocation3], 0
    %9 = vsyncpa [#allocation6], 0
    %10 = vsyncpa [#allocation4], 0
    // Predicated region
    $region2: #{tpu_custom_call.1} parent=1 // pred_check
      _
    $region3: #{tpu_custom_call.1} parent=1 // pred_check_branch
      %12 = sbr.rel (0) target = $region5
    $region4: #{tpu_custom_call.1} parent=1 // pred_region
      %s14 = ssub.s32 1280, 1280
      %15 = vsyncadd [#allocation3], %s14
      %s16 = sshll.u32 [#allocation2], 4
      %s17 = int_to_ptr.vmem [resolvable:$true] %s16
      %22 = dma.hbm_to_vmem [thread:$0]  %s0, 1280, %s17, [#allocation3], 128, 128, 8
    $region5: #{tpu_custom_call.1} parent=1 // pred_fallthru
      _
    // Predicated region
    $region6: #{tpu_custom_call.1} parent=1 // pred_check
      _
    $region7: #{tpu_custom_call.1} parent=1 // pred_check_branch
      %24 = sbr.rel (0) target = $region9
    $region8: #{tpu_custom_call.1} parent=1 // pred_region
      %s26 = ssub.s32 2048, 2048
      %27 = vsyncadd [#allocation6], %s26
      %s28 = sshll.u32 [#allocation5], 4
      %s29 = int_to_ptr.vmem [resolvable:$true] %s28
      %34 = dma.hbm_to_vmem [thread:$0]  %s1, 2048, %s29, [#allocation6], 128, 128, 8
    $region9: #{tpu_custom_call.1} parent=1 // pred_fallthru
      _
    // Predicated region
    $region10: #{tpu_custom_call.1} parent=1 // pred_check
      _
    $region11: #{tpu_custom_call.1} parent=1 // pred_check_branch
      %36 = sbr.rel (0) target = $region13
    $region12: #{tpu_custom_call.1} parent=1 // pred_region
      %s38 = ssub.s32 1024, 1024
      %39 = vsyncadd [#allocation6], %s38
      %s40 = sshll.u32 [#allocation7], 4
      %s41 = int_to_ptr.vmem [resolvable:$true] %s40
      %46 = dma.hbm_to_vmem [thread:$0]  %s2, 1024, %s41, [#allocation6], 64, 64, 4
    $region13: #{tpu_custom_call.1} parent=1 // pred_fallthru
      _
    // Predicated region
    $region14: #{tpu_custom_call.1} parent=1 // pred_check
      _
    $region15: #{tpu_custom_call.1} parent=1 // pred_check_branch
      %48 = sbr.rel (0) target = $region17
    $region16: #{tpu_custom_call.1} parent=1 // pred_region
      %49 = dma.done [#allocation3], 1280
    $region17: #{tpu_custom_call.1} parent=1 // pred_fallthru
      _
    // Predicated region
    $region18: #{tpu_custom_call.1} parent=1 // pred_check
      _
    $region19: #{tpu_custom_call.1} parent=1 // pred_check_branch
      %51 = sbr.rel (0) target = $region21
    $region20: #{tpu_custom_call.1} parent=1 // pred_region
      %52 = dma.done [#allocation6], 2048
    $region21: #{tpu_custom_call.1} parent=1 // pred_fallthru
      _
    // Predicated region
    $region22: #{tpu_custom_call.1} parent=1 // pred_check
      _
    $region23: #{tpu_custom_call.1} parent=1 // pred_check_branch
      %54 = sbr.rel (0) target = $region25
    $region24: #{tpu_custom_call.1} parent=1 // pred_region
      %55 = dma.done [#allocation6], 1024
    $region25: #{tpu_custom_call.1} parent=1 // pred_fallthru
      _
    %v57 = vld [vmem:[#allocation2] sm:$0xff]
    %v58 = vld [vmem:[#allocation2 + $0x8] sm:$0xff]
    %v59 = vld [vmem:[#allocation2 + $0x10] sm:$0xff]
    %v60 = vld [vmem:[#allocation2 + $0x18] sm:$0xff]
    %v61 = vld [vmem:[#allocation2 + $0x20] sm:$0xff]
    %v62 = vpack.c.bf16 %v58, %v57
    %v63 = vpack.c.bf16 %v60, %v59
    %v64 = vpack.c.bf16 %v61, %v61
    %v65 = vld [vmem:[#allocation5] sm:$0xff]
    %v66 = vld [vmem:[#allocation5 + $0x8] sm:$0xff]
    %v67 = vld [vmem:[#allocation5 + $0x10] sm:$0xff]
    %v68 = vld [vmem:[#allocation5 + $0x18] sm:$0xff]
    %v69 = vld [vmem:[#allocation5 + $0x20] sm:$0xff]
    %v70 = vld [vmem:[#allocation5 + $0x28] sm:$0xff]
    %v71 = vld [vmem:[#allocation5 + $0x30] sm:$0xff]
    %v72 = vld [vmem:[#allocation5 + $0x38] sm:$0xff]
    %s73 = scalar_lea.vmem [#allocation2], 40
    %v74 = vld [vmem:[%s73] sm:$0xff]
    %v75 = vld [vmem:[%s73 + $0x8] sm:$0xff]
    %v76 = vld [vmem:[%s73 + $0x10] sm:$0xff]
    %v77 = vld [vmem:[%s73 + $0x18] sm:$0xff]
    %v78 = vld [vmem:[%s73 + $0x20] sm:$0xff]
    %v79 = vpack.c.bf16 %v75, %v74
    %v80 = vpack.c.bf16 %v77, %v76
    %v81 = vpack.c.bf16 %v78, %v78
    %s82 = scalar_lea.vmem [#allocation5], 64
    %v83 = vld [vmem:[%s82] sm:$0xff]
    %v84 = vld [vmem:[%s82 + $0x8] sm:$0xff]
    %v85 = vld [vmem:[%s82 + $0x10] sm:$0xff]
    %v86 = vld [vmem:[%s82 + $0x18] sm:$0xff]
    %v87 = vld [vmem:[%s82 + $0x20] sm:$0xff]
    %v88 = vld [vmem:[%s82 + $0x28] sm:$0xff]
    %v89 = vld [vmem:[%s82 + $0x30] sm:$0xff]
    %v90 = vld [vmem:[%s82 + $0x38] sm:$0xff]
    %v99 = vunpack.c.l.b16 %v83
    %v100 = vunpack.c.h.b16 %v83
    %v101 = vunpack.c.l.b16 %v84
    %v102 = vunpack.c.h.b16 %v84
    %v103 = vunpack.c.l.b16 %v85
    %v104 = vunpack.c.h.b16 %v85
    %v105 = vunpack.c.l.b16 %v86
    %v106 = vunpack.c.h.b16 %v86
    %v107 = vunpack.c.l.b16 %v87
    %v108 = vunpack.c.h.b16 %v87
    %v109 = vunpack.c.l.b16 %v88
    %v110 = vunpack.c.h.b16 %v88
    %v111 = vunpack.c.l.b16 %v89
    %v112 = vunpack.c.h.b16 %v89
    %v113 = vunpack.c.l.b16 %v90
    %v114 = vunpack.c.h.b16 %v90
    %v115 = vpack.c.b16 %v101, %v99
    %v116 = vpack.c.b16 %v102, %v100
    %v117 = vpack.c.b16 %v105, %v103
    %v118 = vpack.c.b16 %v106, %v104
    %v119 = vpack.c.b16 %v109, %v107
    %v120 = vpack.c.b16 %v110, %v108
    %v121 = vpack.c.b16 %v113, %v111
    %v122 = vpack.c.b16 %v114, %v112
    %vm131 = vcmask 523264
    %v133 = vsel %vm131, %v79, 0
    %v136 = vsel %vm131, %v80, 0
    %v139 = vsel %vm131, %v81, 0
    %141 = vmatprep.subr.bf16.mxu0 0
    %142 = vmatpush1.bf16.msra.mxu0 0
    %143 = vmatprep.subr.bf16.mxu0 0
    %144 = vmatpush1.bf16.msra.mxu0 0
    %145 = vmatprep.subr.bf16.mxu0 0
    %146 = vmatpush1.bf16.msra.mxu0 0
    %147 = vmatprep.subr.bf16.mxu0 0
    %148 = vmatpush1.bf16.msra.mxu0 0
    %149 = vmatprep.subr.bf16.mxu0 %v122
    %150 = vmatpush1.bf16.msra.mxu0 %v121
    %151 = vmatprep.subr.bf16.mxu0 %v120
    %152 = vmatpush1.bf16.msra.mxu0 %v119
    %153 = vmatprep.subr.bf16.mxu0 %v118
    %154 = vmatpush1.bf16.msra.mxu0 %v117
    %155 = vmatprep.subr.bf16.mxu0 %v116
    %156 = vmatpush1.bf16.msra.mxu0 %v115
    %157 = vmatprep.subr.bf16.mxu0 0
    %158 = vmatpush2.bf16.msra.mxu0 0
    %159 = vmatprep.subr.bf16.mxu0 0
    %160 = vmatpush2.bf16.msra.mxu0 0
    %161 = vmatprep.subr.bf16.mxu0 0
    %162 = vmatpush2.bf16.msra.mxu0 0
    %163 = vmatprep.subr.bf16.mxu0 0
    %164 = vmatpush2.bf16.msra.mxu0 0
    %165 = vmatprep.subr.bf16.mxu0 0
    %166 = vmatpush2.bf16.msra.mxu0 0
    %167 = vmatprep.subr.bf16.mxu0 0
    %168 = vmatpush2.bf16.msra.mxu0 0
    %169 = vmatprep.subr.bf16.mxu0 0
    %170 = vmatpush2.bf16.msra.mxu0 0
    %171 = vmatprep.subr.bf16.mxu0 0
    %172 = vmatpush2.bf16.msra.mxu0 0
    %173 = vmatprep.mubr.bf16.mxu0 0
    %174 = vmatmul.mubr.bf16.gmra.mxu0 %v133
    %v175 = vpop.f32.mrf.mxu0
    %v176 = vadd.f32 0.0, %v175
    %v177 = vpop.f32.mrf.mxu0
    %v178 = vadd.f32 0.0, %v177
    %v179 = vpop.f32.mrf.mxu0
    %v180 = vadd.f32 0.0, %v179
    %v181 = vpop.f32.mrf.mxu0
    %v182 = vadd.f32 0.0, %v181
    %183 = vmatprep.mubr.bf16.mxu0 0
    %184 = vmatmul.mubr.bf16.gmra.mxu0 %v136
    %v185 = vpop.f32.mrf.mxu0
    %v186 = vadd.f32 0.0, %v185
    %v187 = vpop.f32.mrf.mxu0
    %v188 = vadd.f32 0.0, %v187
    %v189 = vpop.f32.mrf.mxu0
    %v190 = vadd.f32 0.0, %v189
    %v191 = vpop.f32.mrf.mxu0
    %v192 = vadd.f32 0.0, %v191
    %193 = vmatprep.mubr.bf16.mxu0 0
    %194 = vmatmul.mubr.bf16.gmra.mxu0 %v139
    %v195 = vpop.f32.mrf.mxu0
    %v196 = vadd.f32 0.0, %v195
    %v197 = vpop.f32.mrf.mxu0
    %v198 = vadd.f32 0.0, %v197
    %v199 = vpop.f32.mrf.mxu0
    %v200 = vpop.f32.mrf.mxu0
    %201 = vdwg.mxu0
    %v210 = vunpack.c.l.b16 %v65
    %v211 = vunpack.c.h.b16 %v65
    %v212 = vunpack.c.l.b16 %v66
    %v213 = vunpack.c.h.b16 %v66
    %v214 = vunpack.c.l.b16 %v67
    %v215 = vunpack.c.h.b16 %v67
    %v216 = vunpack.c.l.b16 %v68
    %v217 = vunpack.c.h.b16 %v68
    %v218 = vunpack.c.l.b16 %v69
    %v219 = vunpack.c.h.b16 %v69
    %v220 = vunpack.c.l.b16 %v70
    %v221 = vunpack.c.h.b16 %v70
    %v222 = vunpack.c.l.b16 %v71
    %v223 = vunpack.c.h.b16 %v71
    %v224 = vunpack.c.l.b16 %v72
    %v225 = vunpack.c.h.b16 %v72
    %v226 = vpack.c.b16 %v212, %v210
    %v227 = vpack.c.b16 %v213, %v211
    %v228 = vpack.c.b16 %v216, %v214
    %v229 = vpack.c.b16 %v217, %v215
    %v230 = vpack.c.b16 %v220, %v218
    %v231 = vpack.c.b16 %v221, %v219
    %v232 = vpack.c.b16 %v224, %v222
    %v233 = vpack.c.b16 %v225, %v223
    %v243 = vsel %vm131, %v62, 0
    %v246 = vsel %vm131, %v63, 0
    %v249 = vsel %vm131, %v64, 0
    %251 = vmatprep.subr.bf16.mxu0 0
    %252 = vmatpush1.bf16.msra.mxu0 0
    %253 = vmatprep.subr.bf16.mxu0 0
    %254 = vmatpush1.bf16.msra.mxu0 0
    %255 = vmatprep.subr.bf16.mxu0 0
    %256 = vmatpush1.bf16.msra.mxu0 0
    %257 = vmatprep.subr.bf16.mxu0 0
    %258 = vmatpush1.bf16.msra.mxu0 0
    %259 = vmatprep.subr.bf16.mxu0 %v233
    %260 = vmatpush1.bf16.msra.mxu0 %v232
    %261 = vmatprep.subr.bf16.mxu0 %v231
    %262 = vmatpush1.bf16.msra.mxu0 %v230
    %263 = vmatprep.subr.bf16.mxu0 %v229
    %264 = vmatpush1.bf16.msra.mxu0 %v228
    %265 = vmatprep.subr.bf16.mxu0 %v227
    %266 = vmatpush1.bf16.msra.mxu0 %v226
    %267 = vmatprep.subr.bf16.mxu0 0
    %268 = vmatpush2.bf16.msra.mxu0 0
    %269 = vmatprep.subr.bf16.mxu0 0
    %270 = vmatpush2.bf16.msra.mxu0 0
    %271 = vmatprep.subr.bf16.mxu0 0
    %272 = vmatpush2.bf16.msra.mxu0 0
    %273 = vmatprep.subr.bf16.mxu0 0
    %274 = vmatpush2.bf16.msra.mxu0 0
    %275 = vmatprep.subr.bf16.mxu0 0
    %276 = vmatpush2.bf16.msra.mxu0 0
    %277 = vmatprep.subr.bf16.mxu0 0
    %278 = vmatpush2.bf16.msra.mxu0 0
    %279 = vmatprep.subr.bf16.mxu0 0
    %280 = vmatpush2.bf16.msra.mxu0 0
    %281 = vmatprep.subr.bf16.mxu0 0
    %282 = vmatpush2.bf16.msra.mxu0 0
    %283 = vmatprep.mubr.bf16.mxu0 0
    %284 = vmatmul.mubr.bf16.gmra.mxu0 %v243
    %v285 = vpop.f32.mrf.mxu0
    %v286 = vadd.f32 %v176, %v285
    %v287 = vpop.f32.mrf.mxu0
    %v288 = vadd.f32 %v178, %v287
    %v289 = vpop.f32.mrf.mxu0
    %v290 = vadd.f32 %v180, %v289
    %v291 = vpop.f32.mrf.mxu0
    %v292 = vadd.f32 %v182, %v291
    %293 = vmatprep.mubr.bf16.mxu0 0
    %294 = vmatmul.mubr.bf16.gmra.mxu0 %v246
    %v295 = vpop.f32.mrf.mxu0
    %v296 = vadd.f32 %v186, %v295
    %v297 = vpop.f32.mrf.mxu0
    %v298 = vadd.f32 %v188, %v297
    %v299 = vpop.f32.mrf.mxu0
    %v300 = vadd.f32 %v190, %v299
    %v301 = vpop.f32.mrf.mxu0
    %v302 = vadd.f32 %v192, %v301
    %303 = vmatprep.mubr.bf16.mxu0 0
    %304 = vmatmul.mubr.bf16.gmra.mxu0 %v249
    %v305 = vpop.f32.mrf.mxu0
    %v306 = vadd.f32 %v196, %v305
    %v307 = vpop.f32.mrf.mxu0
    %v308 = vadd.f32 %v198, %v307
    %v309 = vpop.f32.mrf.mxu0
    %v310 = vpop.f32.mrf.mxu0
    %311 = vdwg.mxu0
    %v312 = vmul.f32 %v286, %v286
    %v313 = vmul.f32 %v290, %v290
    %v314 = vmul.f32 %v296, %v296
    %v315 = vmul.f32 %v300, %v300
    %v316 = vmul.f32 %v306, %v306
    %v317 = vmul.f32 %v288, %v288
    %v318 = vmul.f32 %v292, %v292
    %v319 = vmul.f32 %v298, %v298
    %v320 = vmul.f32 %v302, %v302
    %v321 = vmul.f32 %v308, %v308
    %v322 = vadd.f32 %v312, %v317
    %v323 = vadd.f32 %v313, %v318
    %v324 = vadd.f32 %v314, %v319
    %v325 = vadd.f32 %v315, %v320
    %v326 = vadd.f32 %v316, %v321
    %v327 = vpack.c.bf16 %v323, %v322
    %v328 = vpack.c.bf16 %v325, %v324
    %v329 = vpack.c.bf16 %v326, %v326
    %v330 = vld [vmem:[#allocation7] sm:$0xf]
    %v331 = vld [vmem:[#allocation7 + $0x4] sm:$0xf]
    %v332 = vld [vmem:[#allocation7 + $0x8] sm:$0xf]
    %v333 = vld [vmem:[#allocation7 + $0xc] sm:$0xf]
    %v334 = vld [vmem:[#allocation7 + $0x10] sm:$0xf]
    %v335 = vld [vmem:[#allocation7 + $0x14] sm:$0xf]
    %v336 = vld [vmem:[#allocation7 + $0x18] sm:$0xf]
    %v337 = vld [vmem:[#allocation7 + $0x1c] sm:$0xf]
    %v338 = vld [vmem:[#allocation7 + $0x20] sm:$0xf]
    %v339 = vld [vmem:[#allocation7 + $0x24] sm:$0xf]
    %v340 = vld [vmem:[#allocation7 + $0x28] sm:$0xf]
    %v341 = vld [vmem:[#allocation7 + $0x2c] sm:$0xf]
    %v342 = vld [vmem:[#allocation7 + $0x30] sm:$0xf]
    %v343 = vld [vmem:[#allocation7 + $0x34] sm:$0xf]
    %v344 = vld [vmem:[#allocation7 + $0x38] sm:$0xf]
    %v345 = vld [vmem:[#allocation7 + $0x3c] sm:$0xf]
    %v362 = vunpack.c.l.b16 %v330
    %v363 = vunpack.c.l.b16 %v331
    %v364 = vunpack.c.l.b16 %v332
    %v365 = vunpack.c.l.b16 %v333
    %v366 = vunpack.c.l.b16 %v334
    %v367 = vunpack.c.l.b16 %v335
    %v368 = vunpack.c.l.b16 %v336
    %v369 = vunpack.c.l.b16 %v337
    %v370 = vunpack.c.l.b16 %v338
    %v371 = vunpack.c.l.b16 %v339
    %v372 = vunpack.c.l.b16 %v340
    %v373 = vunpack.c.l.b16 %v341
    %v374 = vunpack.c.l.b16 %v342
    %v375 = vunpack.c.l.b16 %v343
    %v376 = vunpack.c.l.b16 %v344
    %v377 = vunpack.c.l.b16 %v345
    %v378 = vpack.c.b16 %v363, %v362
    %v379 = vpack.c.b16 %v365, %v364
    %v380 = vpack.c.b16 %v367, %v366
    %v381 = vpack.c.b16 %v369, %v368
    %v382 = vpack.c.b16 %v371, %v370
    %v383 = vpack.c.b16 %v373, %v372
    %v384 = vpack.c.b16 %v375, %v374
    %v385 = vpack.c.b16 %v377, %v376
    %394 = vmatprep.subr.bf16.mxu0 0
    %395 = vmatpush1.bf16.msra.mxu0 %v385
    %396 = vmatprep.subr.bf16.mxu0 0
    %397 = vmatpush1.bf16.msra.mxu0 %v384
    %398 = vmatprep.subr.bf16.mxu0 0
    %399 = vmatpush1.bf16.msra.mxu0 %v383
    %400 = vmatprep.subr.bf16.mxu0 0
    %401 = vmatpush1.bf16.msra.mxu0 %v382
    %402 = vmatprep.subr.bf16.mxu0 0
    %403 = vmatpush1.bf16.msra.mxu0 %v381
    %404 = vmatprep.subr.bf16.mxu0 0
    %405 = vmatpush1.bf16.msra.mxu0 %v380
    %406 = vmatprep.subr.bf16.mxu0 0
    %407 = vmatpush1.bf16.msra.mxu0 %v379
    %408 = vmatprep.subr.bf16.mxu0 0
    %409 = vmatpush1.bf16.msra.mxu0 %v378
    %410 = vmatprep.subr.bf16.mxu0 0
    %411 = vmatpush2.bf16.msra.mxu0 0
    %412 = vmatprep.subr.bf16.mxu0 0
    %413 = vmatpush2.bf16.msra.mxu0 0
    %414 = vmatprep.subr.bf16.mxu0 0
    %415 = vmatpush2.bf16.msra.mxu0 0
    %416 = vmatprep.subr.bf16.mxu0 0
    %417 = vmatpush2.bf16.msra.mxu0 0
    %418 = vmatprep.subr.bf16.mxu0 0
    %419 = vmatpush2.bf16.msra.mxu0 0
    %420 = vmatprep.subr.bf16.mxu0 0
    %421 = vmatpush2.bf16.msra.mxu0 0
    %422 = vmatprep.subr.bf16.mxu0 0
    %423 = vmatpush2.bf16.msra.mxu0 0
    %424 = vmatprep.subr.bf16.mxu0 0
    %425 = vmatpush2.bf16.msra.mxu0 0
    %426 = vmatprep.mubr.bf16.mxu0 0
    %427 = vmatmul.mubr.bf16.gmra.mxu0 %v327
    %v428 = vpop.f32.mrf.mxu0
    %v429 = vadd.f32 1e-06, %v428
    %v430 = vpop.f32.mrf.mxu0
    %v431 = vpop.f32.mrf.mxu0
    %v432 = vadd.f32 1e-06, %v431
    %v433 = vpop.f32.mrf.mxu0
    %434 = vmatprep.mubr.bf16.mxu0 0
    %435 = vmatmul.mubr.bf16.gmra.mxu0 %v328
    %v436 = vpop.f32.mrf.mxu0
    %v437 = vadd.f32 1e-06, %v436
    %v438 = vpop.f32.mrf.mxu0
    %v439 = vpop.f32.mrf.mxu0
    %v440 = vadd.f32 1e-06, %v439
    %v441 = vpop.f32.mrf.mxu0
    %442 = vmatprep.mubr.bf16.mxu0 0
    %443 = vmatmul.mubr.bf16.gmra.mxu0 %v329
    %v444 = vpop.f32.mrf.mxu0
    %v445 = vadd.f32 1e-06, %v444
    %v446 = vpop.f32.mrf.mxu0
    %v447 = vpop.f32.mrf.mxu0
    %v448 = vpop.f32.mrf.mxu0
    %449 = vdwg.mxu0
    %v450 = vlog2.pop %v429
    %v451 = vmul.f32 %v450, 0.6931472
    %v452 = vlog2.pop %v432
    %v453 = vmul.f32 %v452, 0.6931472
    %v454 = vlog2.pop %v437
    %v455 = vmul.f32 %v454, 0.6931472
    %v456 = vlog2.pop %v440
    %v457 = vmul.f32 %v456, 0.6931472
    %v458 = vlog2.pop %v445
    %v459 = vmul.f32 %v458, 0.6931472
    %460 = vst [vmem:[#allocation8] sm:$0xff] %v451
    %461 = vst [vmem:[#allocation8 + $0x8] sm:$0xff] %v453
    %462 = vst [vmem:[#allocation8 + $0x10] sm:$0xff] %v455
    %463 = vst [vmem:[#allocation8 + $0x18] sm:$0xff] %v457
    %464 = vst [vmem:[#allocation8 + $0x20] sm:$0xff] %v459
    // Predicated region
    $region26: #{tpu_custom_call.1} parent=1 // pred_check
      _
    $region27: #{tpu_custom_call.1} parent=1 // pred_check_branch
      %466 = sbr.rel (0) target = $region29
    $region28: #{tpu_custom_call.1} parent=1 // pred_region
      %s468 = ssub.s32 640, 640
      %469 = vsyncadd [#allocation4], %s468
      %s470 = sshll.u32 [#allocation8], 4
      %s471 = int_to_ptr.vmem [resolvable:$true] %s470
      %476 = dma.vmem_to_hbm [thread:$0]  %s471, 640, %s3, [#allocation4], 128, 128, 8
    $region29: #{tpu_custom_call.1} parent=1 // pred_fallthru
      _
    // Predicated region
    $region30: #{tpu_custom_call.1} parent=1 // pred_check
      _
    $region31: #{tpu_custom_call.1} parent=1 // pred_check_branch
      %478 = sbr.rel (0) target = $region33
    $region32: #{tpu_custom_call.1} parent=1 // pred_region
      %479 = dma.done [#allocation4], 640
    $region33: #{tpu_custom_call.1} parent=1 // pred_fallthru
      _
    %480 = vsyncpa [#allocation3], 1
    %481 = vsyncpa [#allocation6], 1
    %482 = vsyncpa [#allocation4], 1

</llo_original>
